<compile_context>
chip_gen: v5e
topology: v5e:2x2
jax: 0.10.0
libtpu: 0.0.40
codegen_flags: <defaults>
</compile_context>

<pallas_src>
import functools

import jax
import jax.numpy as jnp
import numpy as np
from jax import lax
from jax.experimental import pallas as pl
from jax.experimental.pallas import tpu as pltpu

T_REDUCE = 200
TIMESTEP = 200
THETA = float(T_REDUCE) / float(TIMESTEP) - 0.001  # 0.999

LANE = 128  # lane width (last dim of every block)


@functools.lru_cache(maxsize=None)
def _budgets():
    """Per-generation (vmem_limit_bytes, per-block byte budget)."""
    phys = None
    try:
        info = pltpu.get_tpu_info()
        for name in ("vmem_capacity_bytes", "vmem_size_bytes", "vmem_bytes"):
            val = getattr(info, name, None)
            if val:
                phys = int(val)
                break
    except Exception:
        phys = None
    if phys is not None and phys >= 128 * 1024 * 1024:
        # v5e / v6e: 128 MiB physical VMEM per TensorCore.
        vmem_limit = 96 * 1024 * 1024
        block_budget = 16 * 1024 * 1024
    else:
        # v7x (64 MiB per TensorCore) or unknown: stay conservative.
        cap = phys if phys is not None else 64 * 1024 * 1024
        vmem_limit = min(44 * 1024 * 1024, int(cap * 0.7))
        block_budget = max(2 * 1024 * 1024, vmem_limit // 5)
    # in + out double-buffered ~= 4 * block_budget must fit vmem_limit.
    return vmem_limit, block_budget


def _choose_sub(T, Mb, block_budget):
    """Pick SUB (multiple of 8) so one (T, SUB, 128) f32 block ~= block_budget."""
    bytes_per_row = T * LANE * 4
    min_block_bytes = 2 * 1024 * 1024
    sub = max(8, (block_budget // bytes_per_row) // 8 * 8)
    Mb8 = pl.cdiv(Mb, 8) * 8
    sub = min(sub, Mb8)
    # Prefer >= ~8 grid steps (pipelining depth + v7x 2-TC sharding), but never
    # shrink blocks below ~2 MiB just to manufacture extra steps.
    while (sub > 8 and pl.cdiv(Mb8, sub) < 8
           and ((sub // 2) // 8 * 8) * bytes_per_row >= min_block_bytes):
        sub = max(8, (sub // 2) // 8 * 8)
    return sub


def _spike_kernel(x_ref, o_ref, cnt_ref, *, theta, T, row_groups, unroll):
    """x_ref/o_ref: (T, SUB, 128).  cnt_ref: (1, 8, 128) per-block spike counts."""
    th = jnp.float32(theta)
    out_dtype = o_ref.dtype

    def body(i, cnt):
        r0 = pl.multiple_of(i * 8, 8)
        v = jnp.zeros((8, LANE), jnp.float32)       # vreg-resident carry
        for t in range(T):                          # static full unroll over time
            v = v + x_ref[t, pl.ds(r0, 8), :].astype(jnp.float32)
            m = v >= th                              # mask computed once
            o_ref[t, pl.ds(r0, 8), :] = m.astype(out_dtype)
            v = jnp.where(m, v - th, v)              # soft reset (no multiply)
            cnt = cnt + m.astype(jnp.float32)        # fused spike count
        return cnt

    cnt = lax.fori_loop(0, row_groups, body,
                        jnp.zeros((8, LANE), jnp.float32), unroll=unroll)
    cnt_ref[0] = cnt


@functools.partial(jax.jit, static_argnames=("theta",))
def _get_spikes_with_count(x, theta):
    """x: (N, C, H, W, T) -> (spikes of same shape/dtype, per-call spike count)."""
    N, C, H, W, T = x.shape
    M = N * C * H * W

    vmem_limit, block_budget = _budgets()
    Mb = pl.cdiv(M, LANE)
    sub = _choose_sub(T, Mb, block_budget)
    num_blocks = pl.cdiv(Mb, sub)
    Mb_pad = num_blocks * sub
    M_pad = Mb_pad * LANE

    # Layout glue (one XLA relayout each way).  Zero-padded neurons never spike
    # (theta > 0), so the fused spike count stays exact.
    # TODO(synk): fold this relayout into the producer/consumer layers or do it
    # in-kernel on the idle XLU to remove ~2 extra HBM passes.
    x2 = jnp.transpose(x.reshape(M, T), (1, 0))          # (T, M)
    if M_pad != M:
        x2 = jnp.pad(x2, ((0, 0), (0, M_pad - M)))
    x3 = x2.reshape(T, Mb_pad, LANE)

    row_groups = sub // 8
    unroll = 4 if row_groups % 4 == 0 else (2 if row_groups % 2 == 0 else 1)

    spikes3, partial = pl.pallas_call(
        functools.partial(_spike_kernel, theta=theta, T=T,
                          row_groups=row_groups, unroll=unroll),
        out_shape=(
            # TODO(synk): emit bf16/int8 spikes if downstream layers accept it;
            # halves/quarters the write + relayout traffic of this mem-bound op.
            jax.ShapeDtypeStruct((T, Mb_pad, LANE), x.dtype),
            jax.ShapeDtypeStruct((num_blocks, 8, LANE), jnp.float32),
        ),
        grid_spec=pltpu.PrefetchScalarGridSpec(
            num_scalar_prefetch=0,
            grid=(num_blocks,),
            in_specs=[pl.BlockSpec((T, sub, LANE), lambda i: (0, i, 0))],
            out_specs=[
                pl.BlockSpec((T, sub, LANE), lambda i: (0, i, 0)),
                pl.BlockSpec((1, 8, LANE), lambda i: (i, 0, 0)),
            ],
        ),
        compiler_params=pltpu.CompilerParams(
            dimension_semantics=("parallel",),
            vmem_limit_bytes=vmem_limit,
        ),
    )(x3)

    # Per-block partials are exact integers (<= row_groups*T << 2^24); the
    # cross-block f32 sum is near-exact.  Cross-call accumulation is float64
    # on the host (see NewSpike) to avoid f32 saturation over a training run.
    count = jnp.sum(partial)
    spikes = jnp.transpose(spikes3.reshape(T, M_pad)[:, :M], (1, 0))
    return spikes.reshape(N, C, H, W, T), count


def get_spikes(x, theta=THETA):
    """Spikes only (catCuda.getSpikes equivalent)."""
    spikes, _ = _get_spikes_with_count(x, theta=float(theta))
    return spikes


class NewSpike:
    """JAX/Pallas counterpart of the PyTorch NewSpike module."""

    def __init__(self, T=4):
        self.T = T
        self._pending = []            # per-call device counts, flushed lazily
        self._total_num_ones = 0.0    # host float64 running total

    def __call__(self, x):
        spikes, count = _get_spikes_with_count(x, theta=THETA)
        self._pending.append(count)   # no forced per-call device->host sync
        if len(self._pending) >= 256:
            self._flush()
        return spikes

    def _flush(self):
        if self._pending:
            vals = jax.device_get(self._pending)
            self._total_num_ones += float(np.sum(np.asarray(vals, dtype=np.float64)))
            self._pending = []

    def get_total_num_ones(self):
        self._flush()
        return self._total_num_ones

    def reset_total_num_ones(self):
        self._pending = []
        self._total_num_ones = 0.0


def _reference_get_spikes(x_np, theta):
    """Pure-numpy reference of catCuda.getSpikes semantics."""
    T = x_np.shape[-1]
    flat = x_np.reshape(-1, T).astype(np.float32)
    out = np.zeros_like(flat)
    v = np.zeros(flat.shape[0], dtype=np.float32)
    for t in range(T):
        v = v + flat[:, t]
        spk = (v >= np.float32(theta)).astype(np.float32)
        out[:, t] = spk
        v = v - np.float32(theta) * spk
    return out.reshape(x_np.shape)


if __name__ == "__main__":
    key = jax.random.PRNGKey(0)
    # Small shapes consistent with the module: NCHW conv activations + time dim.
    N, C, H, W, T = 2, 4, 8, 8, 8
    x = jax.random.uniform(key, (N, C, H, W, T), dtype=jnp.float32,
                           minval=0.0, maxval=1.0)

    module = NewSpike(T=T)
    spikes = module(x)
    spikes = jax.block_until_ready(spikes)

    ref = _reference_get_spikes(np.asarray(x), THETA)
    assert np.array_equal(np.asarray(spikes), ref), "spike mismatch vs reference"
    assert abs(module.get_total_num_ones() - float(ref.sum())) < 1e-3, "count mismatch"

    print("KERNEL_OK")
</pallas_src>

<mosaic_0001>
module attributes {stable_mosaic.version = 11 : i64} {
  func.func @_spike_kernel(%arg0: i32, %arg1: memref<8x8x128xf32, #tpu.memory_space<vmem>>, %arg2: memref<8x8x128xf32, #tpu.memory_space<vmem>>, %arg3: memref<1x8x128xf32, #tpu.memory_space<vmem>>) attributes {dimension_semantics = [#tpu.dimension_semantics<parallel>], iteration_bounds = array<i64: 1>, scalar_prefetch = 0 : i64, scratch_operands = 0 : i64, tpu.core_type = #tpu.core_type<tc>, window_params = [{transform_indices = @transform_0, window_bounds = array<i64: 8, 8, 128>}, {transform_indices = @transform_1, window_bounds = array<i64: 8, 8, 128>}, {transform_indices = @transform_2, window_bounds = array<i64: 1, 8, 128>}]} {
    %cst = arith.constant 0.000000e+00 : f32
    %0 = vector.broadcast %cst : f32 to vector<8x128xf32>
    %cst_0 = arith.constant 9.990000e-01 : f32
    %c0_i32 = arith.constant 0 : i32
    %c8_i32 = arith.constant 8 : i32
    %1 = arith.muli %c0_i32, %c8_i32 : i32
    %2 = tpu.assume_multiple %1, 8 : i32
    %cst_1 = arith.constant 0.000000e+00 : f32
    %3 = vector.broadcast %cst_1 : f32 to vector<8x128xf32>
    %c0 = arith.constant 0 : index
    %4 = arith.index_cast %2 : i32 to index
    %c0_2 = arith.constant 0 : index
    %5 = vector.load %arg1[%c0, %4, %c0_2] : memref<8x8x128xf32, #tpu.memory_space<vmem>>, vector<1x8x128xf32>
    %6 = vector.shape_cast %5 : vector<1x8x128xf32> to vector<8x128xf32>
    %7 = arith.addf %3, %6 : vector<8x128xf32>
    %8 = vector.broadcast %cst_0 : f32 to vector<8x128xf32>
    %9 = arith.cmpf oge, %7, %8 : vector<8x128xf32>
    %10 = arith.extui %9 : vector<8x128xi1> to vector<8x128xi32>
    %11 = arith.sitofp %10 : vector<8x128xi32> to vector<8x128xf32>
    %c0_3 = arith.constant 0 : index
    %12 = arith.index_cast %2 : i32 to index
    %c0_4 = arith.constant 0 : index
    %13 = vector.load %arg2[%c0_3, %12, %c0_4] : memref<8x8x128xf32, #tpu.memory_space<vmem>>, vector<1x8x128xf32>
    %14 = vector.shape_cast %13 : vector<1x8x128xf32> to vector<8x128xf32>
    %15 = vector.shape_cast %11 : vector<8x128xf32> to vector<1x8x128xf32>
    tpu.vector_store %arg2[%c0_3, %12, %c0_4], %15 {strides = array<i32>} : memref<8x8x128xf32, #tpu.memory_space<vmem>>, vector<1x8x128xf32>,
    %16 = vector.broadcast %cst_0 : f32 to vector<8x128xf32>
    %17 = arith.subf %7, %16 : vector<8x128xf32>
    %18 = arith.select %9, %17, %7 : vector<8x128xi1>, vector<8x128xf32>
    %19 = arith.extui %9 : vector<8x128xi1> to vector<8x128xi32>
    %20 = arith.sitofp %19 : vector<8x128xi32> to vector<8x128xf32>
    %21 = arith.addf %0, %20 : vector<8x128xf32>
    %c1 = arith.constant 1 : index
    %22 = arith.index_cast %2 : i32 to index
    %c0_5 = arith.constant 0 : index
    %23 = vector.load %arg1[%c1, %22, %c0_5] : memref<8x8x128xf32, #tpu.memory_space<vmem>>, vector<1x8x128xf32>
    %24 = vector.shape_cast %23 : vector<1x8x128xf32> to vector<8x128xf32>
    %25 = arith.addf %18, %24 : vector<8x128xf32>
    %26 = vector.broadcast %cst_0 : f32 to vector<8x128xf32>
    %27 = arith.cmpf oge, %25, %26 : vector<8x128xf32>
    %28 = arith.extui %27 : vector<8x128xi1> to vector<8x128xi32>
    %29 = arith.sitofp %28 : vector<8x128xi32> to vector<8x128xf32>
    %c1_6 = arith.constant 1 : index
    %30 = arith.index_cast %2 : i32 to index
    %c0_7 = arith.constant 0 : index
    %31 = vector.load %arg2[%c1_6, %30, %c0_7] : memref<8x8x128xf32, #tpu.memory_space<vmem>>, vector<1x8x128xf32>
    %32 = vector.shape_cast %31 : vector<1x8x128xf32> to vector<8x128xf32>
    %33 = vector.shape_cast %29 : vector<8x128xf32> to vector<1x8x128xf32>
    tpu.vector_store %arg2[%c1_6, %30, %c0_7], %33 {strides = array<i32>} : memref<8x8x128xf32, #tpu.memory_space<vmem>>, vector<1x8x128xf32>,
    %34 = vector.broadcast %cst_0 : f32 to vector<8x128xf32>
    %35 = arith.subf %25, %34 : vector<8x128xf32>
    %36 = arith.select %27, %35, %25 : vector<8x128xi1>, vector<8x128xf32>
    %37 = arith.extui %27 : vector<8x128xi1> to vector<8x128xi32>
    %38 = arith.sitofp %37 : vector<8x128xi32> to vector<8x128xf32>
    %39 = arith.addf %21, %38 : vector<8x128xf32>
    %c2 = arith.constant 2 : index
    %40 = arith.index_cast %2 : i32 to index
    %c0_8 = arith.constant 0 : index
    %41 = vector.load %arg1[%c2, %40, %c0_8] : memref<8x8x128xf32, #tpu.memory_space<vmem>>, vector<1x8x128xf32>
    %42 = vector.shape_cast %41 : vector<1x8x128xf32> to vector<8x128xf32>
    %43 = arith.addf %36, %42 : vector<8x128xf32>
    %44 = vector.broadcast %cst_0 : f32 to vector<8x128xf32>
    %45 = arith.cmpf oge, %43, %44 : vector<8x128xf32>
    %46 = arith.extui %45 : vector<8x128xi1> to vector<8x128xi32>
    %47 = arith.sitofp %46 : vector<8x128xi32> to vector<8x128xf32>
    %c2_9 = arith.constant 2 : index
    %48 = arith.index_cast %2 : i32 to index
    %c0_10 = arith.constant 0 : index
    %49 = vector.load %arg2[%c2_9, %48, %c0_10] : memref<8x8x128xf32, #tpu.memory_space<vmem>>, vector<1x8x128xf32>
    %50 = vector.shape_cast %49 : vector<1x8x128xf32> to vector<8x128xf32>
    %51 = vector.shape_cast %47 : vector<8x128xf32> to vector<1x8x128xf32>
    tpu.vector_store %arg2[%c2_9, %48, %c0_10], %51 {strides = array<i32>} : memref<8x8x128xf32, #tpu.memory_space<vmem>>, vector<1x8x128xf32>,
    %52 = vector.broadcast %cst_0 : f32 to vector<8x128xf32>
    %53 = arith.subf %43, %52 : vector<8x128xf32>
    %54 = arith.select %45, %53, %43 : vector<8x128xi1>, vector<8x128xf32>
    %55 = arith.extui %45 : vector<8x128xi1> to vector<8x128xi32>
    %56 = arith.sitofp %55 : vector<8x128xi32> to vector<8x128xf32>
    %57 = arith.addf %39, %56 : vector<8x128xf32>
    %c3 = arith.constant 3 : index
    %58 = arith.index_cast %2 : i32 to index
    %c0_11 = arith.constant 0 : index
    %59 = vector.load %arg1[%c3, %58, %c0_11] : memref<8x8x128xf32, #tpu.memory_space<vmem>>, vector<1x8x128xf32>
    %60 = vector.shape_cast %59 : vector<1x8x128xf32> to vector<8x128xf32>
    %61 = arith.addf %54, %60 : vector<8x128xf32>
    %62 = vector.broadcast %cst_0 : f32 to vector<8x128xf32>
    %63 = arith.cmpf oge, %61, %62 : vector<8x128xf32>
    %64 = arith.extui %63 : vector<8x128xi1> to vector<8x128xi32>
    %65 = arith.sitofp %64 : vector<8x128xi32> to vector<8x128xf32>
    %c3_12 = arith.constant 3 : index
    %66 = arith.index_cast %2 : i32 to index
    %c0_13 = arith.constant 0 : index
    %67 = vector.load %arg2[%c3_12, %66, %c0_13] : memref<8x8x128xf32, #tpu.memory_space<vmem>>, vector<1x8x128xf32>
    %68 = vector.shape_cast %67 : vector<1x8x128xf32> to vector<8x128xf32>
    %69 = vector.shape_cast %65 : vector<8x128xf32> to vector<1x8x128xf32>
    tpu.vector_store %arg2[%c3_12, %66, %c0_13], %69 {strides = array<i32>} : memref<8x8x128xf32, #tpu.memory_space<vmem>>, vector<1x8x128xf32>,
    %70 = vector.broadcast %cst_0 : f32 to vector<8x128xf32>
    %71 = arith.subf %61, %70 : vector<8x128xf32>
    %72 = arith.select %63, %71, %61 : vector<8x128xi1>, vector<8x128xf32>
    %73 = arith.extui %63 : vector<8x128xi1> to vector<8x128xi32>
    %74 = arith.sitofp %73 : vector<8x128xi32> to vector<8x128xf32>
    %75 = arith.addf %57, %74 : vector<8x128xf32>
    %c4 = arith.constant 4 : index
    %76 = arith.index_cast %2 : i32 to index
    %c0_14 = arith.constant 0 : index
    %77 = vector.load %arg1[%c4, %76, %c0_14] : memref<8x8x128xf32, #tpu.memory_space<vmem>>, vector<1x8x128xf32>
    %78 = vector.shape_cast %77 : vector<1x8x128xf32> to vector<8x128xf32>
    %79 = arith.addf %72, %78 : vector<8x128xf32>
    %80 = vector.broadcast %cst_0 : f32 to vector<8x128xf32>
    %81 = arith.cmpf oge, %79, %80 : vector<8x128xf32>
    %82 = arith.extui %81 : vector<8x128xi1> to vector<8x128xi32>
    %83 = arith.sitofp %82 : vector<8x128xi32> to vector<8x128xf32>
    %c4_15 = arith.constant 4 : index
    %84 = arith.index_cast %2 : i32 to index
    %c0_16 = arith.constant 0 : index
    %85 = vector.load %arg2[%c4_15, %84, %c0_16] : memref<8x8x128xf32, #tpu.memory_space<vmem>>, vector<1x8x128xf32>
    %86 = vector.shape_cast %85 : vector<1x8x128xf32> to vector<8x128xf32>
    %87 = vector.shape_cast %83 : vector<8x128xf32> to vector<1x8x128xf32>
    tpu.vector_store %arg2[%c4_15, %84, %c0_16], %87 {strides = array<i32>} : memref<8x8x128xf32, #tpu.memory_space<vmem>>, vector<1x8x128xf32>,
    %88 = vector.broadcast %cst_0 : f32 to vector<8x128xf32>
    %89 = arith.subf %79, %88 : vector<8x128xf32>
    %90 = arith.select %81, %89, %79 : vector<8x128xi1>, vector<8x128xf32>
    %91 = arith.extui %81 : vector<8x128xi1> to vector<8x128xi32>
    %92 = arith.sitofp %91 : vector<8x128xi32> to vector<8x128xf32>
    %93 = arith.addf %75, %92 : vector<8x128xf32>
    %c5 = arith.constant 5 : index
    %94 = arith.index_cast %2 : i32 to index
    %c0_17 = arith.constant 0 : index
    %95 = vector.load %arg1[%c5, %94, %c0_17] : memref<8x8x128xf32, #tpu.memory_space<vmem>>, vector<1x8x128xf32>
    %96 = vector.shape_cast %95 : vector<1x8x128xf32> to vector<8x128xf32>
    %97 = arith.addf %90, %96 : vector<8x128xf32>
    %98 = vector.broadcast %cst_0 : f32 to vector<8x128xf32>
    %99 = arith.cmpf oge, %97, %98 : vector<8x128xf32>
    %100 = arith.extui %99 : vector<8x128xi1> to vector<8x128xi32>
    %101 = arith.sitofp %100 : vector<8x128xi32> to vector<8x128xf32>
    %c5_18 = arith.constant 5 : index
    %102 = arith.index_cast %2 : i32 to index
    %c0_19 = arith.constant 0 : index
    %103 = vector.load %arg2[%c5_18, %102, %c0_19] : memref<8x8x128xf32, #tpu.memory_space<vmem>>, vector<1x8x128xf32>
    %104 = vector.shape_cast %103 : vector<1x8x128xf32> to vector<8x128xf32>
    %105 = vector.shape_cast %101 : vector<8x128xf32> to vector<1x8x128xf32>
    tpu.vector_store %arg2[%c5_18, %102, %c0_19], %105 {strides = array<i32>} : memref<8x8x128xf32, #tpu.memory_space<vmem>>, vector<1x8x128xf32>,
    %106 = vector.broadcast %cst_0 : f32 to vector<8x128xf32>
    %107 = arith.subf %97, %106 : vector<8x128xf32>
    %108 = arith.select %99, %107, %97 : vector<8x128xi1>, vector<8x128xf32>
    %109 = arith.extui %99 : vector<8x128xi1> to vector<8x128xi32>
    %110 = arith.sitofp %109 : vector<8x128xi32> to vector<8x128xf32>
    %111 = arith.addf %93, %110 : vector<8x128xf32>
    %c6 = arith.constant 6 : index
    %112 = arith.index_cast %2 : i32 to index
    %c0_20 = arith.constant 0 : index
    %113 = vector.load %arg1[%c6, %112, %c0_20] : memref<8x8x128xf32, #tpu.memory_space<vmem>>, vector<1x8x128xf32>
    %114 = vector.shape_cast %113 : vector<1x8x128xf32> to vector<8x128xf32>
    %115 = arith.addf %108, %114 : vector<8x128xf32>
    %116 = vector.broadcast %cst_0 : f32 to vector<8x128xf32>
    %117 = arith.cmpf oge, %115, %116 : vector<8x128xf32>
    %118 = arith.extui %117 : vector<8x128xi1> to vector<8x128xi32>
    %119 = arith.sitofp %118 : vector<8x128xi32> to vector<8x128xf32>
    %c6_21 = arith.constant 6 : index
    %120 = arith.index_cast %2 : i32 to index
    %c0_22 = arith.constant 0 : index
    %121 = vector.load %arg2[%c6_21, %120, %c0_22] : memref<8x8x128xf32, #tpu.memory_space<vmem>>, vector<1x8x128xf32>
    %122 = vector.shape_cast %121 : vector<1x8x128xf32> to vector<8x128xf32>
    %123 = vector.shape_cast %119 : vector<8x128xf32> to vector<1x8x128xf32>
    tpu.vector_store %arg2[%c6_21, %120, %c0_22], %123 {strides = array<i32>} : memref<8x8x128xf32, #tpu.memory_space<vmem>>, vector<1x8x128xf32>,
    %124 = vector.broadcast %cst_0 : f32 to vector<8x128xf32>
    %125 = arith.subf %115, %124 : vector<8x128xf32>
    %126 = arith.select %117, %125, %115 : vector<8x128xi1>, vector<8x128xf32>
    %127 = arith.extui %117 : vector<8x128xi1> to vector<8x128xi32>
    %128 = arith.sitofp %127 : vector<8x128xi32> to vector<8x128xf32>
    %129 = arith.addf %111, %128 : vector<8x128xf32>
    %c7 = arith.constant 7 : index
    %130 = arith.index_cast %2 : i32 to index
    %c0_23 = arith.constant 0 : index
    %131 = vector.load %arg1[%c7, %130, %c0_23] : memref<8x8x128xf32, #tpu.memory_space<vmem>>, vector<1x8x128xf32>
    %132 = vector.shape_cast %131 : vector<1x8x128xf32> to vector<8x128xf32>
    %133 = arith.addf %126, %132 : vector<8x128xf32>
    %134 = vector.broadcast %cst_0 : f32 to vector<8x128xf32>
    %135 = arith.cmpf oge, %133, %134 : vector<8x128xf32>
    %136 = arith.extui %135 : vector<8x128xi1> to vector<8x128xi32>
    %137 = arith.sitofp %136 : vector<8x128xi32> to vector<8x128xf32>
    %c7_24 = arith.constant 7 : index
    %138 = arith.index_cast %2 : i32 to index
    %c0_25 = arith.constant 0 : index
    %139 = vector.load %arg2[%c7_24, %138, %c0_25] : memref<8x8x128xf32, #tpu.memory_space<vmem>>, vector<1x8x128xf32>
    %140 = vector.shape_cast %139 : vector<1x8x128xf32> to vector<8x128xf32>
    %141 = vector.shape_cast %137 : vector<8x128xf32> to vector<1x8x128xf32>
    tpu.vector_store %arg2[%c7_24, %138, %c0_25], %141 {strides = array<i32>} : memref<8x8x128xf32, #tpu.memory_space<vmem>>, vector<1x8x128xf32>,
    %142 = arith.extui %135 : vector<8x128xi1> to vector<8x128xi32>
    %143 = arith.sitofp %142 : vector<8x128xi32> to vector<8x128xf32>
    %144 = arith.addf %129, %143 : vector<8x128xf32>
    %c1_i32 = arith.constant 1 : i32
    %c0_26 = arith.constant 0 : index
    %c0_27 = arith.constant 0 : index
    %c0_28 = arith.constant 0 : index
    %145 = vector.load %arg3[%c0_26, %c0_27, %c0_28] : memref<1x8x128xf32, #tpu.memory_space<vmem>>, vector<1x8x128xf32>
    %146 = vector.shape_cast %145 : vector<1x8x128xf32> to vector<8x128xf32>
    %147 = vector.shape_cast %144 : vector<8x128xf32> to vector<1x8x128xf32>
    tpu.vector_store %arg3[%c0_26, %c0_27, %c0_28], %147 {strides = array<i32>} : memref<1x8x128xf32, #tpu.memory_space<vmem>>, vector<1x8x128xf32>,
    return
  }
  func.func @transform_0(%arg0: i32) -> (i32, i32, i32) {
    %c0_i32 = arith.constant 0 : i32
    %c0_i32_0 = arith.constant 0 : i32
    %c0_i32_1 = arith.constant 0 : i32
    return %c0_i32, %arg0, %c0_i32_0 : i32, i32, i32
  }
  func.func @transform_1(%arg0: i32) -> (i32, i32, i32) {
    %c0_i32 = arith.constant 0 : i32
    %c0_i32_0 = arith.constant 0 : i32
    %c0_i32_1 = arith.constant 0 : i32
    return %c0_i32, %arg0, %c0_i32_0 : i32, i32, i32
  }
  func.func @transform_2(%arg0: i32) -> (i32, i32, i32) {
    %c0_i32 = arith.constant 0 : i32
    %c0_i32_0 = arith.constant 0 : i32
    %c0_i32_1 = arith.constant 0 : i32
    return %arg0, %c0_i32, %c0_i32_0 : i32, i32, i32
  }
}

</mosaic_0001>

<llo_original>
// kernel: _get_spikes_with_count.1
$region0: #{_get_spikes_with_count.1}
  #allocation0 [shape = 'u32[]', space=smem, size = 0x4, offset = 0x4, fixed_abs, tag = 'smem constant byte address 0x4 - core index']
  #allocation1 [shape = 'u32[72,128]{1,0:T(1,128)}', space=vmem, size = 0x9000, scoped, tag = 'internal scratch']
  %s0 = inlined_call_operand.vmem [shape: f32[8,8,128], index: 0, kind: input, shape index: {}]
  %s1 = inlined_call_operand.vmem [shape: f32[8,8,128], index: 1, kind: output, shape index: {0}]
  %s2 = inlined_call_operand.vmem [shape: f32[1,8,128], index: 2, kind: output, shape index: {1}]
  %3 = xla_tuple %s1, %s2
  %s4 = sld [smem:[#allocation0]]
  $region22: #{_get_spikes_with_count.1} parent=0
    _
  %s6 = ssub.s32 1, %s4
  %s7 = scalar_select 0, %s6, %s4
  // Predicated region
  $region2: #{_get_spikes_with_count.1} parent=0 // pred_check
    _
  $region3: #{_get_spikes_with_count.1} parent=0 // pred_check_branch
    %9 = sbr.rel (0) target = $region5
  $region4: #{_get_spikes_with_count.1} parent=0 // pred_region
    _
  $region5: #{_get_spikes_with_count.1} parent=0 // pred_fallthru
    _
  %v10 = vld [vmem:[%s0] sm:$0xff]
  %v11 = vadd.f32 %v10, 0.0
  %vm12 = vcmp.ge.f32.partialorder %v11, 0.999
  %v13 = vsel %vm12, 1, 0
  %v14 = vcvt.s32.f32 %v13
  %15 = vst [vmem:[%s1] sm:$0xff] %v14
  %v16 = vsub.f32 %v11, 0.999
  %v17 = vsel %vm12, %v16, %v11
  %v18 = vadd.f32 %v14, 0.0
  %s19 = sadd.s32 0, 8
  %s20 = scalar_lea.vmem %s0, %s19
  %v21 = vld [vmem:[%s20] sm:$0xff]
  %v22 = vadd.f32 %v17, %v21
  %vm23 = vcmp.ge.f32.partialorder %v22, 0.999
  %v24 = vsel %vm23, 1, 0
  %v25 = vcvt.s32.f32 %v24
  %s26 = scalar_lea.vmem %s1, %s19
  %27 = vst [vmem:[%s26] sm:$0xff] %v25
  %v28 = vsub.f32 %v22, 0.999
  %v29 = vsel %vm23, %v28, %v22
  %v30 = vadd.f32 %v18, %v25
  %s31 = sadd.s32 0, 16
  %s32 = scalar_lea.vmem %s0, %s31
  %v33 = vld [vmem:[%s32] sm:$0xff]
  %v34 = vadd.f32 %v29, %v33
  %vm35 = vcmp.ge.f32.partialorder %v34, 0.999
  %v36 = vsel %vm35, 1, 0
  %v37 = vcvt.s32.f32 %v36
  %s38 = scalar_lea.vmem %s1, %s31
  %39 = vst [vmem:[%s38] sm:$0xff] %v37
  %v40 = vsub.f32 %v34, 0.999
  %v41 = vsel %vm35, %v40, %v34
  %v42 = vadd.f32 %v30, %v37
  %s43 = sadd.s32 0, 24
  %s44 = scalar_lea.vmem %s0, %s43
  %v45 = vld [vmem:[%s44] sm:$0xff]
  %v46 = vadd.f32 %v41, %v45
  %vm47 = vcmp.ge.f32.partialorder %v46, 0.999
  %v48 = vsel %vm47, 1, 0
  %v49 = vcvt.s32.f32 %v48
  %s50 = scalar_lea.vmem %s1, %s43
  %51 = vst [vmem:[%s50] sm:$0xff] %v49
  %v52 = vsub.f32 %v46, 0.999
  %v53 = vsel %vm47, %v52, %v46
  %v54 = vadd.f32 %v42, %v49
  %s55 = sadd.s32 0, 32
  %s56 = scalar_lea.vmem %s0, %s55
  %v57 = vld [vmem:[%s56] sm:$0xff]
  %v58 = vadd.f32 %v53, %v57
  %vm59 = vcmp.ge.f32.partialorder %v58, 0.999
  %v60 = vsel %vm59, 1, 0
  %v61 = vcvt.s32.f32 %v60
  %s62 = scalar_lea.vmem %s1, %s55
  %63 = vst [vmem:[%s62] sm:$0xff] %v61
  %v64 = vsub.f32 %v58, 0.999
  %v65 = vsel %vm59, %v64, %v58
  %v66 = vadd.f32 %v54, %v61
  %s67 = sadd.s32 0, 40
  %s68 = scalar_lea.vmem %s0, %s67
  %v69 = vld [vmem:[%s68] sm:$0xff]
  %v70 = vadd.f32 %v65, %v69
  %vm71 = vcmp.ge.f32.partialorder %v70, 0.999
  %v72 = vsel %vm71, 1, 0
  %v73 = vcvt.s32.f32 %v72
  %s74 = scalar_lea.vmem %s1, %s67
  %75 = vst [vmem:[%s74] sm:$0xff] %v73
  %v76 = vsub.f32 %v70, 0.999
  %v77 = vsel %vm71, %v76, %v70
  %v78 = vadd.f32 %v66, %v73
  %s79 = sadd.s32 0, 48
  %s80 = scalar_lea.vmem %s0, %s79
  %v81 = vld [vmem:[%s80] sm:$0xff]
  %v82 = vadd.f32 %v77, %v81
  %vm83 = vcmp.ge.f32.partialorder %v82, 0.999
  %v84 = vsel %vm83, 1, 0
  %v85 = vcvt.s32.f32 %v84
  %s86 = scalar_lea.vmem %s1, %s79
  %87 = vst [vmem:[%s86] sm:$0xff] %v85
  %v88 = vsub.f32 %v82, 0.999
  %v89 = vsel %vm83, %v88, %v82
  %v90 = vadd.f32 %v78, %v85
  %s91 = sadd.s32 0, 56
  %s92 = scalar_lea.vmem %s0, %s91
  %v93 = vld [vmem:[%s92] sm:$0xff]
  %v94 = vadd.f32 %v89, %v93
  %vm95 = vcmp.ge.f32.partialorder %v94, 0.999
  %v96 = vsel %vm95, 1, 0
  %v97 = vcvt.s32.f32 %v96
  %s98 = scalar_lea.vmem %s1, %s91
  %99 = vst [vmem:[%s98] sm:$0xff] %v97
  %v100 = vadd.f32 %v90, %v97
  %101 = vst [vmem:[%s2] sm:$0xff] %v100
  // Predicated region
  $region6: #{_get_spikes_with_count.1} parent=0 // pred_check
    _
  $region7: #{_get_spikes_with_count.1} parent=0 // pred_check_branch
    %103 = sbr.rel (0) target = $region9
  $region8: #{_get_spikes_with_count.1} parent=0 // pred_region
    _
  $region9: #{_get_spikes_with_count.1} parent=0 // pred_fallthru
    _
  // Predicated region
  $region10: #{_get_spikes_with_count.1} parent=0 // pred_check
    _
  $region11: #{_get_spikes_with_count.1} parent=0 // pred_check_branch
    %105 = sbr.rel (0) target = $region13
  $region12: #{_get_spikes_with_count.1} parent=0 // pred_region
    _
  $region13: #{_get_spikes_with_count.1} parent=0 // pred_fallthru
    _
  // Predicated region
  $region14: #{_get_spikes_with_count.1} parent=0 // pred_check
    _
  $region15: #{_get_spikes_with_count.1} parent=0 // pred_check_branch
    %107 = sbr.rel (0) target = $region17
  $region16: #{_get_spikes_with_count.1} parent=0 // pred_region
    _
  $region17: #{_get_spikes_with_count.1} parent=0 // pred_fallthru
    _
  // Predicated region
  $region18: #{_get_spikes_with_count.1} parent=0 // pred_check
    _
  $region19: #{_get_spikes_with_count.1} parent=0 // pred_check_branch
    %109 = sbr.rel (0) target = $region21
  $region20: #{_get_spikes_with_count.1} parent=0 // pred_region
    _
  $region21: #{_get_spikes_with_count.1} parent=0 // pred_fallthru
    _

</llo_original>
